<compile_context>
chip_gen: v5e
topology: v5e:2x2
jax: 0.10.0
libtpu: 0.0.40
codegen_flags: <defaults>
</compile_context>

<pallas_src>
import functools

import jax
import jax.numpy as jnp
from jax.experimental import pallas as pl
from jax.experimental.pallas import tpu as pltpu


def _round_up(x, m):
    return ((x + m - 1) // m) * m


def _choose_tile(n, preferred, align):
    """Block size for a length-n dim: full dim if it fits (always legal, no
    padding), else prefer a tile that divides n exactly (no pad pass / wasted
    MXU work), else fall back to `preferred` and pad."""
    if n <= preferred:
        return n
    t = (preferred // align) * align
    cand = t
    while cand >= max(align, t // 2):
        if n % cand == 0:
            return cand
        cand -= align
    return t


# ------------------------- tiled matmul (+bias) kernels -----------------------

def _matmul_kernel(x_ref, w_ref, o_ref, acc_ref):
    @pl.when(pl.program_id(2) == 0)
    def _init():
        acc_ref[...] = jnp.zeros_like(acc_ref)

    acc_ref[...] += jnp.dot(x_ref[...], w_ref[...],
                            preferred_element_type=jnp.float32)

    @pl.when(pl.program_id(2) == pl.num_programs(2) - 1)
    def _finish():
        o_ref[...] = acc_ref[...].astype(o_ref.dtype)


def _matmul_bias_kernel(x_ref, w_ref, b_ref, o_ref, acc_ref):
    @pl.when(pl.program_id(2) == 0)
    def _init():
        acc_ref[...] = jnp.zeros_like(acc_ref)

    acc_ref[...] += jnp.dot(x_ref[...], w_ref[...],
                            preferred_element_type=jnp.float32)

    @pl.when(pl.program_id(2) == pl.num_programs(2) - 1)
    def _finish():
        o_ref[...] = (acc_ref[...] + b_ref[...]).astype(o_ref.dtype)


def linear_pallas(x, w, b=None, *, out_dtype=None, tm=512, tn=512, tk=512):
    """y = x @ w (+ b).  x: (M, K), w: (K, N), b: (N,) or None.

    Operands are fed to the MXU in bf16 (f32 accumulation); bias is added in
    f32.  Tiles prefer exact divisors of each dim so no pad pass is emitted
    when shapes already cooperate (e.g. TK=384 for C=768)."""
    M, K = x.shape
    Kw, N = w.shape
    assert K == Kw
    out_dtype = out_dtype or x.dtype

    xb = x if x.dtype == jnp.bfloat16 else x.astype(jnp.bfloat16)
    wb = w if w.dtype == jnp.bfloat16 else w.astype(jnp.bfloat16)

    TM = _choose_tile(M, tm, 8)      # sublane-aligned (or full dim)
    TN = _choose_tile(N, tn, 128)    # lane-dense stores (or full dim)
    TK = _choose_tile(K, tk, 128)
    Mp, Kp, Np = _round_up(M, TM), _round_up(K, TK), _round_up(N, TN)

    if (Mp, Kp) != (M, K):
        xb = jnp.pad(xb, ((0, Mp - M), (0, Kp - K)))
    if (Kp, Np) != (K, N):
        wb = jnp.pad(wb, ((0, Kp - K), (0, Np - N)))

    grid = (Mp // TM, Np // TN, Kp // TK)
    cost = pl.CostEstimate(
        flops=2 * Mp * Np * Kp,
        bytes_accessed=2 * (Mp * Kp * (Np // TN) + Kp * Np * (Mp // TM))
        + Mp * Np * jnp.dtype(out_dtype).itemsize,
        transcendentals=0)

    common = dict(
        out_shape=jax.ShapeDtypeStruct((Mp, Np), out_dtype),
        grid=grid,
        out_specs=pl.BlockSpec((TM, TN), lambda i, j, k: (i, j)),
        scratch_shapes=[pltpu.VMEM((TM, TN), jnp.float32)],
        compiler_params=pltpu.CompilerParams(
            dimension_semantics=("parallel", "parallel", "arbitrary")),
        cost_estimate=cost,
    )
    x_spec = pl.BlockSpec((TM, TK), lambda i, j, k: (i, k))
    w_spec = pl.BlockSpec((TK, TN), lambda i, j, k: (k, j))

    if b is None:
        out = pl.pallas_call(_matmul_kernel,
                             in_specs=[x_spec, w_spec], **common)(xb, wb)
    else:
        bp = b.astype(jnp.float32).reshape(1, N)
        if Np != N:
            bp = jnp.pad(bp, ((0, 0), (0, Np - N)))
        b_spec = pl.BlockSpec((1, TN), lambda i, j, k: (0, j))
        out = pl.pallas_call(_matmul_bias_kernel,
                             in_specs=[x_spec, w_spec, b_spec],
                             **common)(xb, wb, bp)

    if (Mp, Np) != (M, N):
        out = out[:M, :N]
    return out


# --------------------- fused multi-head flash attention ----------------------

def _mha_kernel(q_ref, k_ref, v_ref, o_ref, m_scr, l_scr, acc_scr, *,
                scale, num_heads, kv_tile, n_keys, mask_keys):
    # q_ref/k_ref/v_ref: (T, H, Dh) bf16 views of the qkv activations
    # o_ref:             (T, C)     context block written in (B, N, C) layout
    j = pl.program_id(2)

    @pl.when(j == 0)
    def _init():
        m_scr[...] = jnp.full_like(m_scr, -jnp.inf)
        l_scr[...] = jnp.zeros_like(l_scr)
        acc_scr[...] = jnp.zeros_like(acc_scr)

    # Scale q once per tile (T*H*Dh mults) instead of scaling the (T, TKV)
    # score matrix every kv step.
    q_all = q_ref[...] * scale
    k_all = k_ref[...]
    v_all = v_ref[...]

    if mask_keys:
        kv_idx = j * kv_tile + jax.lax.broadcasted_iota(
            jnp.int32, (1, kv_tile), 1)
        key_ok = kv_idx < n_keys                         # (1, TKV)

    for h in range(num_heads):                           # heads unrolled in-kernel
        q_h = q_all[:, h, :]                             # (T, Dh)  bf16
        k_h = k_all[:, h, :]                             # (TKV, Dh)
        v_h = v_all[:, h, :]

        s = jax.lax.dot_general(q_h, k_h, (((1,), (1,)), ((), ())),
                                preferred_element_type=jnp.float32)
        if mask_keys:
            # -1e30 (finite!) keeps alpha = exp(m_prev - m_new) well defined
            # even if a whole row of a tile is padding; do NOT use -inf here.
            s = jnp.where(key_ok, s, -1e30)

        m_prev = m_scr[h]                                # (T, 1) f32
        m_new = jnp.maximum(m_prev, s.max(axis=-1, keepdims=True))
        alpha = jnp.exp(m_prev - m_new)
        p = jnp.exp(s - m_new)                           # (T, TKV) f32
        l_scr[h] = alpha * l_scr[h] + p.sum(axis=-1, keepdims=True)
        acc_scr[h] = alpha * acc_scr[h] + jax.lax.dot_general(
            p.astype(v_h.dtype), v_h, (((1,), (0,)), ((), ())),
            preferred_element_type=jnp.float32)
        m_scr[h] = m_new

    @pl.when(j == pl.num_programs(2) - 1)
    def _finish():
        heads = []
        for h in range(num_heads):
            inv_l = pl.reciprocal(l_scr[h], approx=True)   # EUP slot, ~free
            heads.append((acc_scr[h] * inv_l).astype(o_ref.dtype))
        # Heads concatenated along lanes -> one lane-dense (T, C) store.
        o_ref[...] = jnp.concatenate(heads, axis=-1)


def mha_pallas(qkv5, *, scale, out_dtype=jnp.bfloat16, tile=512):
    """Fused MHA: softmax(q k^T * scale) @ v for every (batch, head).

    qkv5: (B, N, 3, H, Dh) bf16 (a free view of the QKV-linear output).
    Returns the context directly in (B, N, C) layout (heads interleaved along
    the channel dim) so the projection consumes it without any transpose."""
    B, N, three, H, Dh = qkv5.shape
    assert three == 3
    C = H * Dh

    T = N if N <= tile else tile          # q and kv tile (full-N when it fits)
    Np = _round_up(N, T)
    if Np != N:
        qkv5 = jnp.pad(qkv5, ((0, 0), (0, Np - N), (0, 0), (0, 0), (0, 0)))

    kernel = functools.partial(
        _mha_kernel, scale=float(scale), num_heads=H, kv_tile=T,
        n_keys=N, mask_keys=(Np != N))

    steps_q = Np // T
    cost = pl.CostEstimate(
        flops=4 * B * Np * Np * H * Dh,
        bytes_accessed=2 * B * C * (Np + 2 * steps_q * Np + Np),
        transcendentals=B * H * Np * Np)

    out = pl.pallas_call(
        kernel,
        out_shape=jax.ShapeDtypeStruct((B, Np, C), out_dtype),
        grid=(B, Np // T, Np // T),
        in_specs=[
            # Last two block dims (H, Dh) equal the full dims -> always legal;
            # head_dim is NOT padded to 128 (no wasted HBM/MXU/VPU work).
            pl.BlockSpec((None, T, None, H, Dh), lambda b, i, j: (b, i, 0, 0, 0)),
            pl.BlockSpec((None, T, None, H, Dh), lambda b, i, j: (b, j, 1, 0, 0)),
            pl.BlockSpec((None, T, None, H, Dh), lambda b, i, j: (b, j, 2, 0, 0)),
        ],
        out_specs=pl.BlockSpec((None, T, C), lambda b, i, j: (b, i, 0)),
        scratch_shapes=[
            pltpu.VMEM((H, T, 1), jnp.float32),    # running max per head
            pltpu.VMEM((H, T, 1), jnp.float32),    # running denom per head
            pltpu.VMEM((H, T, Dh), jnp.float32),   # f32 output accumulator
        ],
        compiler_params=pltpu.CompilerParams(
            dimension_semantics=("parallel", "parallel", "arbitrary")),
        cost_estimate=cost,
    )(qkv5, qkv5, qkv5)

    if Np != N:
        # Padded query rows carry garbage that is simply dropped here.
        out = out[:, :N]
    return out


# ------------------------------ full forward ---------------------------------

def attention_forward(x, qkv_w, qkv_b, proj_w, proj_b, *, num_heads,
                      qk_scale=None):
    """Matches Attention.forward (weights in (in, out) layout).
    attn_drop / proj_drop are identity at ratio 0.0 (module default)."""
    B, N, C = x.shape
    H = num_heads
    Dh = C // H
    assert H * Dh == C
    scale = qk_scale if qk_scale is not None else Dh ** (-0.5)

    # 1) QKV projection.  qkv_bias=False -> no bias operand at all.
    #    Output stored bf16 so the attention kernel gets MXU-native operands
    #    with no extra cast pass and half the HBM traffic.
    qkv = linear_pallas(x.reshape(B * N, C), qkv_w, qkv_b,
                        out_dtype=jnp.bfloat16)                   # (B*N, 3C)

    # 2) Fused attention straight off the (B, N, 3, H, Dh) view (free reshape,
    #    no HBM transpose); context comes back already in (B, N, C) layout.
    qkv5 = qkv.reshape(B, N, 3, H, Dh)
    ctx = mha_pallas(qkv5, scale=scale)                           # (B, N, C) bf16

    # 3) Output projection back to f32.
    out = linear_pallas(ctx.reshape(B * N, C), proj_w, proj_b,
                        out_dtype=jnp.float32)
    return out.reshape(B, N, C)


def reference_attention(x, qkv_w, qkv_b, proj_w, proj_b, *, num_heads,
                        qk_scale=None):
    """Pure-JAX (f32) mirror of the PyTorch Attention.forward."""
    B, N, C = x.shape
    H = num_heads
    Dh = C // H
    scale = qk_scale if qk_scale is not None else Dh ** (-0.5)
    qkv = x.reshape(B * N, C) @ qkv_w
    if qkv_b is not None:
        qkv = qkv + qkv_b
    qkv = qkv.reshape(B, N, 3, H, Dh).transpose(2, 0, 3, 1, 4)
    q, k, v = qkv[0], qkv[1], qkv[2]
    attn = jnp.einsum("bhqd,bhkd->bhqk", q, k) * scale
    attn = jax.nn.softmax(attn, axis=-1)
    ctx = jnp.einsum("bhqk,bhkd->bhqd", attn, v)
    ctx = ctx.transpose(0, 2, 1, 3).reshape(B * N, C)
    return (ctx @ proj_w + proj_b).reshape(B, N, C)


if __name__ == "__main__":
    # Small config consistent with the module: B=2, seq N=16, dim C=32, 4 heads.
    B, N, C = 2, 16, 32
    num_heads = 4  # head_dim = 8

    key = jax.random.PRNGKey(0)
    kx, kw1, kw2, kb2 = jax.random.split(key, 4)
    x = jax.random.normal(kx, (B, N, C), dtype=jnp.float32)
    qkv_w = jax.random.normal(kw1, (C, 3 * C), dtype=jnp.float32) * 0.02
    qkv_b = None  # qkv_bias=False in the module -> bias operand skipped
    proj_w = jax.random.normal(kw2, (C, C), dtype=jnp.float32) * 0.02
    proj_b = jax.random.normal(kb2, (C,), dtype=jnp.float32) * 0.02

    out = attention_forward(x, qkv_w, qkv_b, proj_w, proj_b,
                            num_heads=num_heads)
    out = jax.block_until_ready(out)

    ref = reference_attention(x, qkv_w, qkv_b, proj_w, proj_b,
                              num_heads=num_heads)
    assert out.shape == (B, N, C)
    max_err = float(jnp.max(jnp.abs(out - ref)))
    # bf16 MXU operands -> compare against the f32 reference at bf16 tolerance.
    assert jnp.allclose(out, ref, atol=2e-2, rtol=2e-2), max_err

    print("KERNEL_OK")
</pallas_src>

<mosaic_0001>
module attributes {stable_mosaic.version = 11 : i64} {
  func.func @_matmul_kernel(%arg0: i32, %arg1: i32, %arg2: i32, %arg3: memref<32x32xbf16, #tpu.memory_space<vmem>>, %arg4: memref<32x96xbf16, #tpu.memory_space<vmem>>, %arg5: memref<32x96xbf16, #tpu.memory_space<vmem>>, %arg6: memref<32x96xf32, #tpu.memory_space<vmem>>) attributes {dimension_semantics = [#tpu.dimension_semantics<parallel>, #tpu.dimension_semantics<parallel>, #tpu.dimension_semantics<arbitrary>], iteration_bounds = array<i64: 1, 1, 1>, scalar_prefetch = 0 : i64, scratch_operands = 1 : i64, tpu.core_type = #tpu.core_type<tc>, window_params = [{transform_indices = @transform_0, window_bounds = array<i64: 32, 32>}, {transform_indices = @transform_1, window_bounds = array<i64: 32, 96>}, {transform_indices = @transform_2, window_bounds = array<i64: 32, 96>}]} {
    %c0_i32 = arith.constant 0 : i32
    %0 = arith.cmpi eq, %arg2, %c0_i32 : i32
    %1 = arith.extui %0 : i1 to i32
    %c0_i32_0 = arith.constant 0 : i32
    %2 = arith.cmpi ne, %1, %c0_i32_0 : i32
    scf.if %2 {
      %cst_10 = arith.constant 0.000000e+00 : f32
      %12 = vector.broadcast %cst_10 : f32 to vector<32x96xf32>
      %c0_11 = arith.constant 0 : index
      %c0_12 = arith.constant 0 : index
      %13 = vector.load %arg6[%c0_11, %c0_12] : memref<32x96xf32, #tpu.memory_space<vmem>>, vector<32x96xf32>
      tpu.vector_store %arg6[%c0_11, %c0_12], %12 {strides = array<i32>} : memref<32x96xf32, #tpu.memory_space<vmem>>, vector<32x96xf32>,
    } else {
    }
    %c0 = arith.constant 0 : index
    %c0_1 = arith.constant 0 : index
    %3 = vector.load %arg6[%c0, %c0_1] : memref<32x96xf32, #tpu.memory_space<vmem>>, vector<32x96xf32>
    %c0_2 = arith.constant 0 : index
    %c0_3 = arith.constant 0 : index
    %4 = vector.load %arg3[%c0_2, %c0_3] : memref<32x32xbf16, #tpu.memory_space<vmem>>, vector<32x32xbf16>
    %c0_4 = arith.constant 0 : index
    %c0_5 = arith.constant 0 : index
    %5 = vector.load %arg4[%c0_4, %c0_5] : memref<32x96xbf16, #tpu.memory_space<vmem>>, vector<32x96xbf16>
    %cst = arith.constant dense<0.000000e+00> : vector<32x96xf32>
    %6 = tpu.matmul %4, %5, %cst {dimension_numbers = #tpu.dot_dimension_numbers<[1], [0], [0], [1], [0, 0, 1, 1], [], []>} : vector<32x32xbf16>, vector<32x96xbf16>, vector<32x96xf32> -> vector<32x96xf32>
    %7 = arith.addf %3, %6 : vector<32x96xf32>
    %c0_6 = arith.constant 0 : index
    %c0_7 = arith.constant 0 : index
    %8 = vector.load %arg6[%c0_6, %c0_7] : memref<32x96xf32, #tpu.memory_space<vmem>>, vector<32x96xf32>
    tpu.vector_store %arg6[%c0_6, %c0_7], %7 {strides = array<i32>} : memref<32x96xf32, #tpu.memory_space<vmem>>, vector<32x96xf32>,
    %c0_i32_8 = arith.constant 0 : i32
    %9 = arith.cmpi eq, %arg2, %c0_i32_8 : i32
    %10 = arith.extui %9 : i1 to i32
    %c0_i32_9 = arith.constant 0 : i32
    %11 = arith.cmpi ne, %10, %c0_i32_9 : i32
    scf.if %11 {
      %c0_10 = arith.constant 0 : index
      %c0_11 = arith.constant 0 : index
      %12 = vector.load %arg6[%c0_10, %c0_11] : memref<32x96xf32, #tpu.memory_space<vmem>>, vector<32x96xf32>
      %13 = arith.truncf %12 : vector<32x96xf32> to vector<32x96xbf16>
      %c0_12 = arith.constant 0 : index
      %c0_13 = arith.constant 0 : index
      %14 = vector.load %arg5[%c0_12, %c0_13] : memref<32x96xbf16, #tpu.memory_space<vmem>>, vector<32x96xbf16>
      tpu.vector_store %arg5[%c0_12, %c0_13], %13 {strides = array<i32>} : memref<32x96xbf16, #tpu.memory_space<vmem>>, vector<32x96xbf16>,
    } else {
    }
    return
  }
  func.func @transform_0(%arg0: i32, %arg1: i32, %arg2: i32) -> (i32, i32) {
    %c0_i32 = arith.constant 0 : i32
    return %arg0, %arg2 : i32, i32
  }
  func.func @transform_1(%arg0: i32, %arg1: i32, %arg2: i32) -> (i32, i32) {
    %c0_i32 = arith.constant 0 : i32
    return %arg2, %arg1 : i32, i32
  }
  func.func @transform_2(%arg0: i32, %arg1: i32, %arg2: i32) -> (i32, i32) {
    %c0_i32 = arith.constant 0 : i32
    return %arg0, %arg1 : i32, i32
  }
}

</mosaic_0001>

<llo_original>
// kernel: tpu_custom_call.1
$region0: #{tpu_custom_call.1}
  #allocation0 [shape = 'u32[]', space=smem, size = 0x4, offset = 0x4, fixed_abs, tag = 'smem constant byte address 0x4 - core index']
  #allocation1 [shape = 'u32[72,128]{1,0:T(1,128)}', space=vmem, size = 0x9000, scoped, tag = 'internal scratch']
  #allocation2 [shape = 'f32[32,96]{1,0:T(8,128)}', space=vmem, size = 0x4000, scoped, tag = 'scratch operand']
  %s0 = inlined_call_operand.hbm [shape: bf16[32,32], index: 0, kind: input, shape index: {}]
  %s1 = inlined_call_operand.hbm [shape: bf16[32,96], index: 1, kind: input, shape index: {}]
  %s2 = inlined_call_operand.hbm [shape: bf16[32,96], index: 2, kind: output, shape index: {}]
  %s3 = sld [smem:[#allocation0]]
  $region34: #{tpu_custom_call.1} parent=0
    _
  %s5 = ssub.s32 1, %s3
  %s6 = scalar_select 0, %s5, %s3
  $region1: #{tpu_custom_call.1} parent=0
    #allocation3 [shape = 'u8[8192]{0}', space=vmem, size = 0x2000, scoped, tag = 'input window, operand 0, single buffered']
    #allocation4 [shape = 's32[1]{0}', space=sflag, size = 0x4, scoped, tag = 'scoped memory for tpu_custom_call.1']
    #allocation5 [shape = 's32[1]{0}', space=sflag, size = 0x4, scoped, tag = 'scoped memory for tpu_custom_call.1']
    #allocation6 [shape = 'u8[8192]{0}', space=vmem, size = 0x2000, scoped, tag = 'input window, operand 1, single buffered']
    #allocation7 [shape = 's32[1]{0}', space=sflag, size = 0x4, scoped, tag = 'scoped memory for tpu_custom_call.1']
    #allocation8 [shape = 'u8[8192]{0}', space=vmem, size = 0x2000, scoped, tag = 'output window, operand 0, single buffered']
    %7 = vsyncpa [#allocation4], 0
    %8 = vsyncpa [#allocation7], 0
    %9 = vsyncpa [#allocation5], 0
    // Predicated region
    $region2: #{tpu_custom_call.1} parent=1 // pred_check
      _
    $region3: #{tpu_custom_call.1} parent=1 // pred_check_branch
      %11 = sbr.rel (0) target = $region5
    $region4: #{tpu_custom_call.1} parent=1 // pred_region
      %13 = vsyncadd [#allocation4], 0
      %s14 = sshll.u32 %s0, 4
      %s15 = int_to_ptr.hbm [resolvable:$true] %s14
      %s16 = sshll.u32 [#allocation3], 4
      %s17 = int_to_ptr.vmem [resolvable:$true] %s16
      %22 = dma.hbm_to_vmem [thread:$0]  %s15, 256, %s17, [#allocation4], 64, 64, 4
    $region5: #{tpu_custom_call.1} parent=1 // pred_fallthru
      _
    // Predicated region
    $region6: #{tpu_custom_call.1} parent=1 // pred_check
      _
    $region7: #{tpu_custom_call.1} parent=1 // pred_check_branch
      %24 = sbr.rel (0) target = $region9
    $region8: #{tpu_custom_call.1} parent=1 // pred_region
      %26 = vsyncadd [#allocation7], 0
      %s27 = sshll.u32 %s1, 4
      %s28 = int_to_ptr.hbm [resolvable:$true] %s27
      %s29 = sshll.u32 [#allocation6], 4
      %s30 = int_to_ptr.vmem [resolvable:$true] %s29
      %35 = dma.hbm_to_vmem [thread:$0]  %s28, 256, %s30, [#allocation7], 64, 64, 4
    $region9: #{tpu_custom_call.1} parent=1 // pred_fallthru
      _
    // Predicated region
    $region10: #{tpu_custom_call.1} parent=1 // pred_check
      _
    $region11: #{tpu_custom_call.1} parent=1 // pred_check_branch
      %37 = sbr.rel (0) target = $region13
    $region12: #{tpu_custom_call.1} parent=1 // pred_region
      %39 = dma.done [#allocation4], 256
    $region13: #{tpu_custom_call.1} parent=1 // pred_fallthru
      _
    // Predicated region
    $region14: #{tpu_custom_call.1} parent=1 // pred_check
      _
    $region15: #{tpu_custom_call.1} parent=1 // pred_check_branch
      %41 = sbr.rel (0) target = $region17
    $region16: #{tpu_custom_call.1} parent=1 // pred_region
      %43 = dma.done [#allocation7], 256
    $region17: #{tpu_custom_call.1} parent=1 // pred_fallthru
      _
    %p45 = scmp.eq.s32.totalorder 0, 0
    // Predicated region
    $region18: #{tpu_custom_call.1} parent=1 // pred_check
      %p46 = pneg %p45
    $region19: #{tpu_custom_call.1} parent=1 // pred_check_branch
      %48 = sbr.rel (%p46) target = $region21
    $region20: #{tpu_custom_call.1} parent=1 // pred_region
      %vm49 = vcmask 785408
      %50 = vst.msk [vmem:[#allocation2] sm:$0xff] %vm49, 0.0
      %51 = vst.msk [vmem:[#allocation2 + $0x8] sm:$0xff] %vm49, 0.0
      %52 = vst.msk [vmem:[#allocation2 + $0x10] sm:$0xff] %vm49, 0.0
      %53 = vst.msk [vmem:[#allocation2 + $0x18] sm:$0xff] %vm49, 0.0
    $region21: #{tpu_custom_call.1} parent=1 // pred_fallthru
      _
    %v54 = vld [vmem:[#allocation2] sm:$0xff]
    %v55 = vld [vmem:[#allocation2 + $0x8] sm:$0xff]
    %v56 = vld [vmem:[#allocation2 + $0x10] sm:$0xff]
    %v57 = vld [vmem:[#allocation2 + $0x18] sm:$0xff]
    %v58 = vld [vmem:[#allocation3] sm:$0xf]
    %v59 = vld [vmem:[#allocation3 + $0x4] sm:$0xf]
    %v60 = vld [vmem:[#allocation3 + $0x8] sm:$0xf]
    %v61 = vld [vmem:[#allocation3 + $0xc] sm:$0xf]
    %v62 = vld [vmem:[#allocation6] sm:$0xf]
    %v63 = vld [vmem:[#allocation6 + $0x4] sm:$0xf]
    %v64 = vld [vmem:[#allocation6 + $0x8] sm:$0xf]
    %v65 = vld [vmem:[#allocation6 + $0xc] sm:$0xf]
    %v70 = vunpack.c.l.b16 %v58
    %v71 = vunpack.c.l.b16 %v59
    %v72 = vunpack.c.l.b16 %v60
    %v73 = vunpack.c.l.b16 %v61
    %v74 = vpack.c.b16 %v71, %v70
    %v75 = vpack.c.b16 %v73, %v72
    %v80 = vunpack.c.l.b16 %v62
    %v81 = vunpack.c.l.b16 %v63
    %v82 = vunpack.c.l.b16 %v64
    %v83 = vunpack.c.l.b16 %v65
    %v84 = vpack.c.b16 %v81, %v80
    %v85 = vpack.c.b16 %v83, %v82
    %vm88 = vcmask 261120
    %v90 = vsel %vm88, %v74, 0
    %v93 = vsel %vm88, %v75, 0
    %95 = vmatpush.bf16.msra.mxu0 0
    %96 = vmatpush.bf16.msra.mxu0 0
    %97 = vmatpush.bf16.msra.mxu0 0
    %98 = vmatpush.bf16.msra.mxu0 0
    %99 = vmatpush.bf16.msra.mxu0 0
    %100 = vmatpush.bf16.msra.mxu0 0
    %101 = vmatpush.bf16.msra.mxu0 %v85
    %102 = vmatpush.bf16.msra.mxu0 %v84
    %103 = vmatmul.bf16.gmra.mxu0 %v90
    %v104 = vpop.f32.mrf.mxu0
    %v105 = vadd.f32 0.0, %v104
    %v106 = vpop.f32.mrf.mxu0
    %v107 = vadd.f32 0.0, %v106
    %108 = vmatmul.bf16.gmra.mxu0 %v93
    %v109 = vpop.f32.mrf.mxu0
    %v110 = vadd.f32 0.0, %v109
    %v111 = vpop.f32.mrf.mxu0
    %v112 = vadd.f32 0.0, %v111
    %113 = vdwg.mxu0
    %v114 = vadd.f32 %v54, %v105
    %v115 = vadd.f32 %v55, %v107
    %v116 = vadd.f32 %v56, %v110
    %v117 = vadd.f32 %v57, %v112
    %vm118 = vcmask 785408
    %119 = vst.msk [vmem:[#allocation2] sm:$0xff] %vm118, %v114
    %120 = vst.msk [vmem:[#allocation2 + $0x8] sm:$0xff] %vm118, %v115
    %121 = vst.msk [vmem:[#allocation2 + $0x10] sm:$0xff] %vm118, %v116
    %122 = vst.msk [vmem:[#allocation2 + $0x18] sm:$0xff] %vm118, %v117
    // Predicated region
    $region22: #{tpu_custom_call.1} parent=1 // pred_check
      %p123 = pneg %p45
    $region23: #{tpu_custom_call.1} parent=1 // pred_check_branch
      %125 = sbr.rel (%p123) target = $region25
    $region24: #{tpu_custom_call.1} parent=1 // pred_region
      %v126 = vld [vmem:[#allocation2] sm:$0xff]
      %v127 = vld [vmem:[#allocation2 + $0x8] sm:$0xff]
      %v128 = vld [vmem:[#allocation2 + $0x10] sm:$0xff]
      %v129 = vld [vmem:[#allocation2 + $0x18] sm:$0xff]
      %v130 = vpack.c.bf16 %v126, %v126
      %v131 = vpack.c.bf16 %v127, %v127
      %v132 = vpack.c.bf16 %v128, %v128
      %v133 = vpack.c.bf16 %v129, %v129
      %vm134 = vcmask 781312
      %135 = vst.msk [vmem:[#allocation8] sm:$0xf] %vm134, %v130
      %136 = vst.msk [vmem:[#allocation8 + $0x4] sm:$0xf] %vm134, %v131
      %137 = vst.msk [vmem:[#allocation8 + $0x8] sm:$0xf] %vm134, %v132
      %138 = vst.msk [vmem:[#allocation8 + $0xc] sm:$0xf] %vm134, %v133
    $region25: #{tpu_custom_call.1} parent=1 // pred_fallthru
      _
    // Predicated region
    $region26: #{tpu_custom_call.1} parent=1 // pred_check
      _
    $region27: #{tpu_custom_call.1} parent=1 // pred_check_branch
      %140 = sbr.rel (0) target = $region29
    $region28: #{tpu_custom_call.1} parent=1 // pred_region
      %142 = vsyncadd [#allocation5], 0
      %s143 = sshll.u32 [#allocation8], 4
      %s144 = int_to_ptr.vmem [resolvable:$true] %s143
      %s145 = sshll.u32 %s2, 4
      %s146 = int_to_ptr.hbm [resolvable:$true] %s145
      %151 = dma.vmem_to_hbm [thread:$0]  %s144, 256, %s146, [#allocation5], 64, 64, 4
    $region29: #{tpu_custom_call.1} parent=1 // pred_fallthru
      _
    // Predicated region
    $region30: #{tpu_custom_call.1} parent=1 // pred_check
      _
    $region31: #{tpu_custom_call.1} parent=1 // pred_check_branch
      %153 = sbr.rel (0) target = $region33
    $region32: #{tpu_custom_call.1} parent=1 // pred_region
      %155 = dma.done [#allocation5], 256
    $region33: #{tpu_custom_call.1} parent=1 // pred_fallthru
      _
    %156 = vsyncpa [#allocation4], 1
    %157 = vsyncpa [#allocation7], 1
    %158 = vsyncpa [#allocation5], 1

</llo_original>
